<compile_context>
chip_gen: v7x
topology: tpu7x:2x2x1
jax: 0.10.0
libtpu: 0.0.40
codegen_flags: <defaults>
</compile_context>

<pallas_src>
import functools

import jax
import jax.numpy as jnp
from jax.experimental import pallas as pl
from jax.experimental.pallas import tpu as pltpu


def _label_smoothing_kernel(logits_ref, target_ref, out_ref, *,
                            confidence, off_value, batch_size, tile_b):
    # (tile_b, C) logits tile; upcast to f32 inside the kernel (v5e has no bf16 VPU/EUP).
    x = logits_ref[...].astype(jnp.float32)
    tb, num_classes = x.shape

    # Numerically stable log-softmax pieces (class axis = lanes).
    m = jnp.max(x, axis=-1, keepdims=True)                                  # (tb, 1)
    shifted = x - m                                                         # (tb, C)
    lse = jnp.log(jnp.sum(jnp.exp(shifted), axis=-1, keepdims=True))        # (tb, 1)

    # Fused smoothing weights: w[c] = off + (conf - off) * [c == target].
    tgt = target_ref[...]                                                   # (tb, 1) i32
    col = jax.lax.broadcasted_iota(jnp.int32, (tb, num_classes), 1)
    w = jnp.where(col == tgt, jnp.float32(confidence), jnp.float32(off_value))
    sum_w = jnp.float32(off_value * (num_classes - 1) + confidence)         # static

    # -sum(true_dist * log_probs) = lse*sum(w) - sum(w*shifted); no (B, C) temps kept.
    ws = jnp.sum(w * shifted, axis=-1, keepdims=True)                       # (tb, 1)
    per_row = lse * sum_w - ws                                              # (tb, 1)

    # Ragged edge tile: rows past the real batch hold garbage (possibly NaN/Inf) —
    # selection-based masking guarantees they contribute exactly 0.
    row = jax.lax.broadcasted_iota(jnp.int32, (tb, 1), 0) + pl.program_id(0) * tile_b
    per_row = jnp.where(row < batch_size, per_row, 0.0)

    # Lane-dense (8, 128) per-tile partial block: zero it, drop the partial at [0, 0].
    out_ref[...] = jnp.zeros_like(out_ref)
    out_ref[0:1, 0:1] = jnp.sum(per_row, axis=0, keepdims=True)             # (1, 1)


def _vmem_budget_bytes():
    """~85% of the chip's real VMEM (128 MiB v5e/v6e, 64 MiB v7x); safe fallback."""
    try:
        cap = int(pltpu.get_tpu_info().vmem_capacity_bytes)
    except Exception:
        cap = 64 << 20
    if cap <= 0:
        cap = 64 << 20
    return max(16 << 20, int(cap * 0.85))


def _sublane_multiple(itemsize):
    # bf16 packs two rows per sublane, int8/fp8 four -> keep tiles dense.
    return {4: 8, 2: 16, 1: 32}.get(itemsize, 8)


def _choose_tile_b(batch, num_classes, itemsize, vmem_budget):
    sub = _sublane_multiple(itemsize)
    c_lane = ((num_classes + 127) // 128) * 128            # lane-padded width in VMEM
    # Per-row VMEM: double-buffered logits + target tiles plus ~4 live f32 temporaries.
    per_row = 2 * c_lane * itemsize + 2 * 128 * 4 + 4 * c_lane * 4
    max_rows = max(sub, int(vmem_budget // per_row))
    # Target >= ~2 MiB of logits per tile so per-step grid overhead is amortized.
    want_rows = max(sub, (2 << 20) // max(1, c_lane * itemsize))
    tile = min(want_rows, max_rows)
    tile = min(tile, ((batch + sub - 1) // sub) * sub)     # no bigger than rounded-up B
    return max(sub, (tile // sub) * sub)


def label_smoothing_loss(logits, target, num_classes, smoothing=0.0, tile_b=None):
    """logits: (B, C) float; target: (B,) int class indices. Returns scalar f32 loss.

    For production shapes feed logits in bf16 (halves HBM traffic on this
    bandwidth-bound kernel); the f32 upcast happens per-tile inside the kernel.
    """
    B, C = logits.shape
    assert C == num_classes
    assert num_classes > 1, "smoothing / (num_classes - 1) undefined for num_classes == 1"
    confidence = 1.0 - smoothing
    off_value = smoothing / (num_classes - 1)

    itemsize = jnp.dtype(logits.dtype).itemsize
    vmem_budget = _vmem_budget_bytes()
    if tile_b is None:
        tile_b = _choose_tile_b(B, C, itemsize, vmem_budget)
    else:
        sub = _sublane_multiple(itemsize)
        tile_b = max(sub, (int(tile_b) // sub) * sub)
    num_tiles = pl.cdiv(B, tile_b)

    target2d = target.astype(jnp.int32).reshape(B, 1)

    kernel = functools.partial(
        _label_smoothing_kernel,
        confidence=float(confidence), off_value=float(off_value),
        batch_size=B, tile_b=tile_b,
    )

    cost = pl.CostEstimate(
        flops=6 * B * C,
        transcendentals=B * C + 2 * B,
        bytes_accessed=B * C * itemsize + B * 4 + num_tiles * 8 * 128 * 4,
    )

    partials = pl.pallas_call(
        kernel,
        out_shape=jax.ShapeDtypeStruct((num_tiles * 8, 128), jnp.float32),
        grid=(num_tiles,),
        in_specs=[
            # Block spans the full class axis (no class pad needed); the batch-axis
            # ragged edge tile is handled by in-kernel row masking (no HBM pad copy).
            pl.BlockSpec((tile_b, C), lambda i: (i, 0)),   # logits tile
            pl.BlockSpec((tile_b, 1), lambda i: (i, 0)),   # target tile
        ],
        out_specs=pl.BlockSpec((8, 128), lambda i: (i, 0)),  # per-tile partial sum
        compiler_params=pltpu.CompilerParams(
            dimension_semantics=("parallel",),
            vmem_limit_bytes=vmem_budget,
        ),
        cost_estimate=cost,
    )(logits, target2d)

    # Final tiny reduction + mean over batch in the wrapper.
    return jnp.sum(partials) / jnp.float32(B)


def _reference(logits, target, num_classes, smoothing):
    # Pure-JAX reference mirroring the PyTorch code.
    log_probs = jax.nn.log_softmax(logits.astype(jnp.float32), axis=-1)
    confidence = 1.0 - smoothing
    true_dist = jnp.full_like(log_probs, smoothing / (num_classes - 1))
    true_dist = true_dist.at[jnp.arange(logits.shape[0]), target].set(confidence)
    return jnp.mean(jnp.sum(-true_dist * log_probs, axis=-1))


if __name__ == "__main__":
    key = jax.random.PRNGKey(0)
    k1, k2, k3, k4, k5, k6 = jax.random.split(key, 6)

    # Test 1: small aligned-ish shapes, single tile, f32.
    B, C, smoothing = 8, 32, 0.1
    logits = jax.random.normal(k1, (B, C), dtype=jnp.float32)
    target = jax.random.randint(k2, (B,), 0, C, dtype=jnp.int32)
    loss = jax.block_until_ready(label_smoothing_loss(logits, target, C, smoothing))
    ref = _reference(logits, target, C, smoothing)
    assert jnp.allclose(loss, ref, atol=1e-5, rtol=1e-4), (loss, ref)

    # Test 2: ragged batch + non-multiple-of-128 class count, forced multi-tile grid
    # (exercises the unpadded edge-tile masking path).
    B2, C2, smoothing2 = 10, 33, 0.2
    logits2 = jax.random.normal(k3, (B2, C2), dtype=jnp.float32)
    target2 = jax.random.randint(k4, (B2,), 0, C2, dtype=jnp.int32)
    loss2 = jax.block_until_ready(
        label_smoothing_loss(logits2, target2, C2, smoothing2, tile_b=8))
    ref2 = _reference(logits2, target2, C2, smoothing2)
    assert jnp.allclose(loss2, ref2, atol=1e-5, rtol=1e-4), (loss2, ref2)

    # Test 3: bf16 logits (production path), adaptive tile (sublane multiple of 16).
    B3, C3, smoothing3 = 24, 160, 0.05
    logits3 = jax.random.normal(k5, (B3, C3), dtype=jnp.float32).astype(jnp.bfloat16)
    target3 = jax.random.randint(k6, (B3,), 0, C3, dtype=jnp.int32)
    loss3 = jax.block_until_ready(label_smoothing_loss(logits3, target3, C3, smoothing3))
    ref3 = _reference(logits3.astype(jnp.float32), target3, C3, smoothing3)
    assert jnp.allclose(loss3, ref3, atol=5e-3, rtol=5e-3), (loss3, ref3)

    print("KERNEL_OK")
</pallas_src>

<mosaic_0001>
module attributes {stable_mosaic.version = 11 : i64} {
  func.func @_label_smoothing_kernel(%arg0: i32, %arg1: memref<8x32xf32, #tpu.memory_space<vmem>>, %arg2: memref<8x1xi32, #tpu.memory_space<vmem>>, %arg3: memref<8x128xf32, #tpu.memory_space<vmem>>) attributes {dimension_semantics = [#tpu.dimension_semantics<parallel>], iteration_bounds = array<i64: 1>, scalar_prefetch = 0 : i64, scratch_operands = 0 : i64, tpu.core_type = #tpu.core_type<tc>, window_params = [{transform_indices = @transform_0, window_bounds = array<i64: 8, 32>}, {transform_indices = @transform_1, window_bounds = array<i64: 8, 1>}, {transform_indices = @transform_2, window_bounds = array<i64: 8, 128>}]} {
    %c0 = arith.constant 0 : index
    %c0_0 = arith.constant 0 : index
    %0 = vector.load %arg1[%c0, %c0_0] : memref<8x32xf32, #tpu.memory_space<vmem>>, vector<8x32xf32>
    %cst = arith.constant dense<0xFF800000> : vector<8xf32>
    %1 = vector.multi_reduction <maximumf>, %0, %cst [1] : vector<8x32xf32> to vector<8xf32>
    %2 = vector.shape_cast %1 : vector<8xf32> to vector<8x1xf32>
    %3 = vector.broadcast %2 : vector<8x1xf32> to vector<8x32xf32>
    %4 = arith.subf %0, %3 : vector<8x32xf32>
    %5 = math.exp %4 : vector<8x32xf32>
    %cst_1 = arith.constant dense<0.000000e+00> : vector<8xf32>
    %6 = vector.multi_reduction <add>, %5, %cst_1 [1] : vector<8x32xf32> to vector<8xf32>
    %7 = vector.shape_cast %6 : vector<8xf32> to vector<8x1xf32>
    %8 = math.log %7 : vector<8x1xf32>
    %c0_2 = arith.constant 0 : index
    %c0_3 = arith.constant 0 : index
    %9 = vector.load %arg2[%c0_2, %c0_3] : memref<8x1xi32, #tpu.memory_space<vmem>>, vector<8x1xi32>
    %10 = tpu.iota {dimensions = array<i32: 1>} : vector<8x32xi32>
    %11 = vector.broadcast %9 : vector<8x1xi32> to vector<8x32xi32>
    %12 = arith.cmpi eq, %10, %11 : vector<8x32xi32>
    %cst_4 = arith.constant 0.899999976 : f32
    %cst_5 = arith.constant 0.0032258064 : f32
    %13 = vector.broadcast %cst_4 : f32 to vector<8x32xf32>
    %14 = vector.broadcast %cst_5 : f32 to vector<8x32xf32>
    %15 = arith.select %12, %13, %14 : vector<8x32xi1>, vector<8x32xf32>
    %16 = arith.mulf %15, %4 : vector<8x32xf32>
    %cst_6 = arith.constant dense<0.000000e+00> : vector<8xf32>
    %17 = vector.multi_reduction <add>, %16, %cst_6 [1] : vector<8x32xf32> to vector<8xf32>
    %18 = vector.shape_cast %17 : vector<8xf32> to vector<8x1xf32>
    %cst_7 = arith.constant 1.000000e+00 : f32
    %19 = vector.broadcast %cst_7 : f32 to vector<8x1xf32>
    %20 = arith.mulf %8, %19 : vector<8x1xf32>
    %21 = arith.subf %20, %18 : vector<8x1xf32>
    %22 = tpu.iota {dimensions = array<i32: 0>} : vector<8x1xi32>
    %c8_i32 = arith.constant 8 : i32
    %23 = arith.muli %arg0, %c8_i32 : i32
    %24 = vector.broadcast %23 : i32 to vector<8x1xi32>
    %25 = arith.addi %22, %24 : vector<8x1xi32>
    %c8_i32_8 = arith.constant 8 : i32
    %26 = vector.broadcast %c8_i32_8 : i32 to vector<8x1xi32>
    %27 = arith.cmpi slt, %25, %26 : vector<8x1xi32>
    %cst_9 = arith.constant 0.000000e+00 : f32
    %28 = vector.broadcast %cst_9 : f32 to vector<8x1xf32>
    %29 = arith.select %27, %21, %28 : vector<8x1xi1>, vector<8x1xf32>
    %cst_10 = arith.constant 0.000000e+00 : f32
    %30 = vector.broadcast %cst_10 : f32 to vector<8x128xf32>
    %c0_11 = arith.constant 0 : index
    %c0_12 = arith.constant 0 : index
    %31 = vector.load %arg3[%c0_11, %c0_12] : memref<8x128xf32, #tpu.memory_space<vmem>>, vector<8x128xf32>
    tpu.vector_store %arg3[%c0_11, %c0_12], %30 {strides = array<i32>} : memref<8x128xf32, #tpu.memory_space<vmem>>, vector<8x128xf32>,
    %cst_13 = arith.constant dense<0.000000e+00> : vector<1xf32>
    %32 = vector.multi_reduction <add>, %29, %cst_13 [0] : vector<8x1xf32> to vector<1xf32>
    %33 = vector.shape_cast %32 : vector<1xf32> to vector<1x1xf32>
    %c0_14 = arith.constant 0 : index
    %c0_15 = arith.constant 0 : index
    %34 = vector.load %arg3[%c0_14, %c0_15] : memref<8x128xf32, #tpu.memory_space<vmem>>, vector<1x1xf32>
    tpu.vector_store %arg3[%c0_14, %c0_15], %33 {strides = array<i32>} : memref<8x128xf32, #tpu.memory_space<vmem>>, vector<1x1xf32>,
    return
  }
  func.func @transform_0(%arg0: i32) -> (i32, i32) {
    %c0_i32 = arith.constant 0 : i32
    %c0_i32_0 = arith.constant 0 : i32
    return %arg0, %c0_i32 : i32, i32
  }
  func.func @transform_1(%arg0: i32) -> (i32, i32) {
    %c0_i32 = arith.constant 0 : i32
    %c0_i32_0 = arith.constant 0 : i32
    return %arg0, %c0_i32 : i32, i32
  }
  func.func @transform_2(%arg0: i32) -> (i32, i32) {
    %c0_i32 = arith.constant 0 : i32
    %c0_i32_0 = arith.constant 0 : i32
    return %arg0, %c0_i32 : i32, i32
  }
}

</mosaic_0001>

<llo_original>
// kernel: tpu_custom_call.1
$region0: #{tpu_custom_call.1}
  #allocation0 [shape = 'u32[]', space=smem, size = 0x4, offset = 0x4, fixed_abs, tag = 'smem constant byte address 0x4 - core index']
  #allocation1 [shape = 'u32[144,128]{1,0:T(1,128)}', space=vmem, size = 0x12000, scoped, tag = 'internal scratch']
  %s0 = inlined_call_operand.vmem [shape: f32[8,32], index: 0, kind: input, shape index: {}]
  %s1 = inlined_call_operand.vmem [shape: s32[8,1], index: 1, kind: input, shape index: {}]
  %s2 = inlined_call_operand.hbm [shape: f32[8,128], index: 2, kind: output, shape index: {}]
  %s3 = sld [smem:[#allocation0]]
  $region18: #{tpu_custom_call.1} parent=0
    _
  %s5 = ssub.s32 1, %s3
  %s6 = scalar_select 0, %s5, %s3
  $region1: #{tpu_custom_call.1} parent=0
    #allocation2 [shape = 'u8[4096]{0}', space=vmem, size = 0x1000, scoped, tag = 'output window, operand 0, single buffered']
    #allocation3 [shape = 's32[1]{0}', space=sflag, size = 0x4, scoped, tag = 'scoped memory for tpu_custom_call.1']
    %7 = vsyncpa [#allocation3], 0
    // Predicated region
    $region2: #{tpu_custom_call.1} parent=1 // pred_check
      _
    $region3: #{tpu_custom_call.1} parent=1 // pred_check_branch
      %9 = sbr.rel (0) target = $region5
    $region4: #{tpu_custom_call.1} parent=1 // pred_region
      _
    $region5: #{tpu_custom_call.1} parent=1 // pred_fallthru
      _
    // Predicated region
    $region6: #{tpu_custom_call.1} parent=1 // pred_check
      _
    $region7: #{tpu_custom_call.1} parent=1 // pred_check_branch
      %11 = sbr.rel (0) target = $region9
    $region8: #{tpu_custom_call.1} parent=1 // pred_region
      _
    $region9: #{tpu_custom_call.1} parent=1 // pred_fallthru
      _
    %v12 = vld [vmem:[%s0] sm:$0xff]
    %vm13 = vcmask 261120
    %v14 = vsel %vm13, %v12, -inf
    %15 = vmax.xlane.f32.xlu0 %v14
    %v16 = vpop.xlane.xlu0 %15
    %v17 = vsub.f32 %v12, %v16
    %v18 = vmul.f32 %v17, 1.442695
    %v19 = vpow.pop %v18
    %v20 = vsel %vm13, %v19, 0.0
    %21 = vadd.xlane.f32.xlu0 %v20
    %v22 = vpop.xlane.xlu0 %21
    %v23 = vlog2.pop %v22
    %v24 = vmul.f32 %v23, 0.6931472
    %v25 = vld [vmem:[%s1] sm:$0xff]
    %v26 = vlaneseq
    %v27 = vand.u32 %v26, 127
    %28 = vset.pattern.permute.xlu0 0
    %29 = vperm.xlu0 %28, %v25
    %v30 = vpop.permute.xlu0 %29
    %vm31 = vcmp.eq.s32.totalorder %v27, %v30
    %v32 = vsel %vm31, 0.9, 0.0032258064
    %v33 = vmul.f32 %v32, %v17
    %v34 = vsel %vm13, %v33, 0.0
    %35 = vadd.xlane.f32.xlu0 %v34
    %v36 = vpop.xlane.xlu0 %35
    %v37 = vsub.f32 %v24, %v36
    %v38 = vlaneseq
    %v39 = vshrl.u32 %v38, 7
    %s40 = smul.u32 0, 8
    %v41 = vstv %s40
    %v42 = vadd.s32 %v39, %v41
    %vm43 = vcmp.lt.s32.totalorder %v42, 8
    %v44 = vsel %vm43, %v37, 0.0
    %45 = vst [vmem:[#allocation2] sm:$0xff] 0.0
    %v46 = vrot.slane %v44, 4
    %v47 = vadd.f32 %v44, %v46
    %v48 = vrot.slane %v47, 2
    %v49 = vadd.f32 %v47, %v48
    %v50 = vrot.slane %v49, 1
    %v51 = vadd.f32 %v49, %v50
    %vm52 = vcmask 0
    %53 = vst.msk [vmem:[#allocation2] sm:$0x1] %vm52, %v51
    // Predicated region
    $region10: #{tpu_custom_call.1} parent=1 // pred_check
      _
    $region11: #{tpu_custom_call.1} parent=1 // pred_check_branch
      %55 = sbr.rel (0) target = $region13
    $region12: #{tpu_custom_call.1} parent=1 // pred_region
      %s57 = ssub.s32 128, 128
      %58 = vsyncadd [#allocation3], %s57
      %s60 = sshll.u32 [#allocation2], 4
      %s61 = int_to_ptr.vmem [resolvable:$true] %s60
      %63 = dma.vmem_to_hbm [thread:$0]  %s61, 128, %s2, [#allocation3]
    $region13: #{tpu_custom_call.1} parent=1 // pred_fallthru
      _
    // Predicated region
    $region14: #{tpu_custom_call.1} parent=1 // pred_check
      _
    $region15: #{tpu_custom_call.1} parent=1 // pred_check_branch
      %65 = sbr.rel (0) target = $region17
    $region16: #{tpu_custom_call.1} parent=1 // pred_region
      %66 = dma.done [#allocation3], 128
    $region17: #{tpu_custom_call.1} parent=1 // pred_fallthru
      _
    %67 = vsyncpa [#allocation3], 1

</llo_original>
